<compile_context>
chip_gen: v7x
topology: tpu7x:2x2x1
jax: 0.10.0
libtpu: 0.0.40
codegen_flags: <defaults>
</compile_context>

<pallas_src>
import math
import functools

import jax
import jax.numpy as jnp
from jax import lax
from jax.experimental import pallas as pl
from jax.experimental.pallas import tpu as pltpu


def lambda_init_fn(depth):
    return 0.8 - 0.6 * math.exp(-0.3 * depth)


_NEG_INF = -1e30


def _pick_tile(dim, cap, align):
    """Largest t dividing dim with t <= cap and (t % align == 0 or t == dim)."""
    if dim <= cap:
        return dim
    t = (min(cap, dim) // align) * align
    while t >= align:
        if dim % t == 0:
            return t
        t -= align
    return dim  # fallback: single block


# --------------------------- per-head projections ---------------------------

def _proj_heads_kernel(x_ref, w_ref, o_ref, acc_ref):
    # x_ref: (1, tm, tk) bf16 ; w_ref: (1, tk, D2) bf16 ; o_ref: (1, 1, tm, D2)
    k = pl.program_id(3)

    @pl.when(k == 0)
    def _():
        acc_ref[...] = jnp.zeros_like(acc_ref)

    acc_ref[...] += jnp.dot(x_ref[0], w_ref[0],
                            preferred_element_type=jnp.float32)

    @pl.when(k == pl.num_programs(3) - 1)
    def _():
        o_ref[0, 0] = acc_ref[...].astype(o_ref.dtype)


def project_to_heads(x, w_heads, *, tm_cap=256, tk_cap=512,
                     out_dtype=jnp.bfloat16):
    """x: (B, T, E) bf16, w_heads: (H, E, D2) bf16 -> (B, H, T, D2) out_dtype."""
    B, T, E = x.shape
    H, E2, D2 = w_heads.shape
    assert E2 == E
    tm = _pick_tile(T, tm_cap, 8)
    tk = _pick_tile(E, tk_cap, 128)
    grid = (B, T // tm, H, E // tk)
    return pl.pallas_call(
        _proj_heads_kernel,
        out_shape=jax.ShapeDtypeStruct((B, H, T, D2), out_dtype),
        grid=grid,
        in_specs=[
            pl.BlockSpec((1, tm, tk), lambda b, ti, h, k: (b, ti, k)),
            pl.BlockSpec((1, tk, D2), lambda b, ti, h, k: (h, k, 0)),
        ],
        out_specs=pl.BlockSpec((1, 1, tm, D2), lambda b, ti, h, k: (b, h, ti, 0)),
        scratch_shapes=[pltpu.VMEM((tm, D2), jnp.float32)],
        compiler_params=pltpu.CompilerParams(
            dimension_semantics=("parallel", "parallel", "parallel", "arbitrary")),
    )(x, w_heads)


# ------------------------------ out projection ------------------------------

def _out_proj_kernel(a_ref, w_ref, o_ref, acc_ref):
    # a_ref: (1, 1, tm, D2) bf16 ; w_ref: (1, D2, tn) bf16 ; o_ref: (1, tm, tn)
    h = pl.program_id(3)

    @pl.when(h == 0)
    def _():
        acc_ref[...] = jnp.zeros_like(acc_ref)

    acc_ref[...] += jnp.dot(a_ref[0, 0], w_ref[0],
                            preferred_element_type=jnp.float32)

    @pl.when(h == pl.num_programs(3) - 1)
    def _():
        o_ref[0] = acc_ref[...].astype(o_ref.dtype)


def out_projection(attn_heads, wo_heads, *, tm_cap=256, tn_cap=512):
    """attn_heads: (B, H, T, D2) bf16, wo_heads: (H, D2, E) bf16 -> (B, T, E) f32."""
    B, H, T, D2 = attn_heads.shape
    E = wo_heads.shape[-1]
    tm = _pick_tile(T, tm_cap, 8)
    tn = _pick_tile(E, tn_cap, 128)
    grid = (B, T // tm, E // tn, H)
    return pl.pallas_call(
        _out_proj_kernel,
        out_shape=jax.ShapeDtypeStruct((B, T, E), jnp.float32),
        grid=grid,
        in_specs=[
            pl.BlockSpec((1, 1, tm, D2), lambda b, ti, ei, h: (b, h, ti, 0)),
            pl.BlockSpec((1, D2, tn), lambda b, ti, ei, h: (h, 0, ei)),
        ],
        out_specs=pl.BlockSpec((1, tm, tn), lambda b, ti, ei, h: (b, ti, ei)),
        scratch_shapes=[pltpu.VMEM((tm, tn), jnp.float32)],
        compiler_params=pltpu.CompilerParams(
            dimension_semantics=("parallel", "parallel", "parallel", "arbitrary")),
    )(attn_heads, wo_heads)


# ------------------------ differential flash attention ----------------------

def _diff_flash_kernel(scalars_ref, gamma_ref, q_ref, k_ref, v_ref, o_ref,
                       m_ref, l_ref, acc_ref, *, scale, eps, blk, n_rep, head_dim):
    qi = pl.program_id(2)
    kv = pl.program_id(3)

    R = n_rep * blk
    D2 = 2 * head_dim

    @pl.when(kv == 0)
    def _():
        m_ref[...] = jnp.full_like(m_ref, _NEG_INF)
        l_ref[...] = jnp.zeros_like(l_ref)
        acc_ref[...] = jnp.zeros_like(acc_ref)

    def accumulate(masked):
        q = q_ref[0].reshape(R, D2)        # n_rep heads stacked along rows (bf16)
        k = k_ref[0, 0]                    # (blk, D2) bf16
        v = v_ref[0, 0]                    # (blk, D2) bf16
        if masked:
            row = lax.broadcasted_iota(jnp.int32, (R, blk), 0)
            col = lax.broadcasted_iota(jnp.int32, (R, blk), 1)
            mask = col <= (row % blk)      # diagonal block: causal within block
        for i, (qb, kb) in enumerate(((q[:, :head_dim], k[:, :head_dim]),
                                      (q[:, head_dim:], k[:, head_dim:]))):
            # qk^T without materializing k.T (contract last dims of both).
            s = lax.dot_general(qb, kb, (((1,), (1,)), ((), ())),
                                preferred_element_type=jnp.float32) * scale
            if masked:
                s = jnp.where(mask, s, _NEG_INF)
            m_prev = m_ref[i]
            m_new = jnp.maximum(m_prev, jnp.max(s, axis=-1, keepdims=True))
            alpha = jnp.exp(m_prev - m_new)
            p = jnp.exp(s - m_new)
            l_ref[i] = alpha * l_ref[i] + jnp.sum(p, axis=-1, keepdims=True)
            acc_ref[i] = alpha * acc_ref[i] + jnp.dot(
                p.astype(v.dtype), v, preferred_element_type=jnp.float32)
            m_ref[i] = m_new

    @pl.when(kv < qi)              # strictly below the diagonal -> no mask
    def _():
        accumulate(masked=False)

    @pl.when(kv == qi)             # diagonal block -> mask, then finalize
    def _():
        accumulate(masked=True)
        lam_full = scalars_ref[0]
        lam_init = scalars_ref[1]
        a1 = acc_ref[0] * pl.reciprocal(l_ref[0], approx=True)
        a2 = acc_ref[1] * pl.reciprocal(l_ref[1], approx=True)
        x = a1 - lam_full * a2                                   # (R, D2) f32
        ms = jnp.mean(x * x, axis=-1, keepdims=True)
        xn = x * lax.rsqrt(ms + eps) * gamma_ref[...]
        o_ref[0] = ((1.0 - lam_init) * xn).reshape(n_rep, blk, D2).astype(o_ref.dtype)
    # KV blocks with kv > qi contribute nothing: compute is skipped and their
    # k/v index_maps are clamped below so no new DMA is issued either.


def diff_attention(q_heads, k_heads, v_heads, gamma, scalars, *,
                   num_heads, num_kv_heads, head_dim, blk_cap=256):
    B, H, T, D2 = q_heads.shape
    n_rep = num_heads // num_kv_heads
    blk = _pick_tile(T, blk_cap, 8)
    nq = T // blk
    R = n_rep * blk
    scale = head_dim ** (-0.5)

    kernel = functools.partial(_diff_flash_kernel, scale=scale, eps=1e-5,
                               blk=blk, n_rep=n_rep, head_dim=head_dim)
    return pl.pallas_call(
        kernel,
        out_shape=jax.ShapeDtypeStruct((B, H, T, D2), jnp.bfloat16),
        grid=(B, num_kv_heads, nq, nq),
        in_specs=[
            pl.BlockSpec(memory_space=pltpu.MemorySpace.SMEM),   # [lam_full, lam_init]
            pl.BlockSpec((1, D2), lambda b, g, qi, kv: (0, 0)),  # RMSNorm gamma
            pl.BlockSpec((1, n_rep, blk, D2),                    # q: all heads of group g
                         lambda b, g, qi, kv: (b, g, qi, 0)),
            pl.BlockSpec((1, 1, blk, D2),                        # k (clamped above diag)
                         lambda b, g, qi, kv: (b, g, jnp.minimum(kv, qi), 0)),
            pl.BlockSpec((1, 1, blk, D2),                        # v (clamped above diag)
                         lambda b, g, qi, kv: (b, g, jnp.minimum(kv, qi), 0)),
        ],
        out_specs=pl.BlockSpec((1, n_rep, blk, D2),
                               lambda b, g, qi, kv: (b, g, qi, 0)),
        scratch_shapes=[
            pltpu.VMEM((2, R, 1), jnp.float32),    # running max (per branch)
            pltpu.VMEM((2, R, 1), jnp.float32),    # running denom (per branch)
            pltpu.VMEM((2, R, D2), jnp.float32),   # running numerator (per branch)
        ],
        compiler_params=pltpu.CompilerParams(
            dimension_semantics=("parallel", "parallel", "parallel", "arbitrary"),
            vmem_limit_bytes=32 * 1024 * 1024),
    )(scalars, gamma, q_heads, k_heads, v_heads)


# ------------------------------ forward pass --------------------------------

def multihead_flash_diff(x, params, *, num_heads, num_kv_heads, depth,
                         attn_block_cap=256, proj_tm_cap=256, proj_tk_cap=512,
                         out_tn_cap=512):
    B, T, E = x.shape
    assert num_heads % num_kv_heads == 0 and E % (2 * num_heads) == 0
    n_rep = num_heads // num_kv_heads
    head_dim = E // num_heads // 2
    D2 = 2 * head_dim
    lambda_init = lambda_init_fn(depth)

    # Weight prep (tiny, done once): per-head layouts so the projection kernels
    # can emit (B, heads, T, 2*head_dim) directly and out_proj consumes it.
    wq = jnp.swapaxes(params["Wq"].reshape(num_heads, D2, E), 1, 2).astype(jnp.bfloat16)
    wk = jnp.swapaxes(params["Wk"].reshape(num_kv_heads, D2, E), 1, 2).astype(jnp.bfloat16)
    wv = jnp.swapaxes(params["Wv"].reshape(num_kv_heads, D2, E), 1, 2).astype(jnp.bfloat16)
    wo = params["Wo"].T.reshape(num_heads, D2, E).astype(jnp.bfloat16)

    xb = x.astype(jnp.bfloat16)
    q_heads = project_to_heads(xb, wq, tm_cap=proj_tm_cap, tk_cap=proj_tk_cap)
    k_heads = project_to_heads(xb, wk, tm_cap=proj_tm_cap, tk_cap=proj_tk_cap)
    v_heads = project_to_heads(xb, wv, tm_cap=proj_tm_cap, tk_cap=proj_tk_cap)

    lam1 = jnp.exp(jnp.sum(params["lambda_q1"] * params["lambda_k1"]))
    lam2 = jnp.exp(jnp.sum(params["lambda_q2"] * params["lambda_k2"]))
    lambda_full = lam1 - lam2 + lambda_init
    scalars = jnp.stack([lambda_full, jnp.float32(lambda_init)]).astype(jnp.float32)
    gamma = params["gamma"].reshape(1, D2).astype(jnp.float32)

    attn = diff_attention(q_heads, k_heads, v_heads, gamma, scalars,
                          num_heads=num_heads, num_kv_heads=num_kv_heads,
                          head_dim=head_dim, blk_cap=attn_block_cap)
    return out_projection(attn, wo, tm_cap=proj_tm_cap, tn_cap=out_tn_cap)


# --------------------------- pure-JAX reference -----------------------------

def reference(x, params, *, num_heads, num_kv_heads, depth):
    B, T, E = x.shape
    n_rep = num_heads // num_kv_heads
    hd = E // num_heads // 2
    scaling = hd ** (-0.5)
    lam_init = lambda_init_fn(depth)

    q = (x @ params["Wq"].T).reshape(B, T, num_heads, 2, hd)
    k = (x @ params["Wk"].T).reshape(B, T, num_kv_heads, 2, hd)
    v = (x @ params["Wv"].T).reshape(B, T, num_kv_heads, 2, hd)
    q1, q2 = q[..., 0, :], q[..., 1, :]
    k1, k2 = k[..., 0, :], k[..., 1, :]
    v1, v2 = v[..., 0, :], v[..., 1, :]

    mask = jnp.tril(jnp.ones((T, T), dtype=bool))

    def fa(qh, kh, vh):
        kh = jnp.repeat(kh, n_rep, axis=2)
        vh = jnp.repeat(vh, n_rep, axis=2)
        s = jnp.einsum("bthd,bshd->bhts", qh, kh) * scaling
        s = jnp.where(mask, s, -jnp.inf)
        p = jax.nn.softmax(s, axis=-1)
        return jnp.einsum("bhts,bshd->bthd", p, vh)

    attn1 = jnp.concatenate([fa(q1, k1, v1), fa(q1, k1, v2)], axis=-1)
    attn2 = jnp.concatenate([fa(q2, k2, v1), fa(q2, k2, v2)], axis=-1)
    lam1 = jnp.exp(jnp.sum(params["lambda_q1"] * params["lambda_k1"]))
    lam2 = jnp.exp(jnp.sum(params["lambda_q2"] * params["lambda_k2"]))
    lam_full = lam1 - lam2 + lam_init
    attn = attn1 - lam_full * attn2
    ms = jnp.mean(attn * attn, axis=-1, keepdims=True)
    attn = attn * lax.rsqrt(ms + 1e-5) * params["gamma"]
    attn = attn * (1.0 - lam_init)
    attn = attn.reshape(B, T, E)
    return attn @ params["Wo"].T


# ---------------------------------- main ------------------------------------

if __name__ == "__main__":
    # Small config chosen so every tiled path is exercised with the caps below:
    # multiple q/kv blocks (causal block skip + online softmax), multiple
    # K-reduction blocks in the projections, multiple N blocks in out_proj.
    embed_dim = 256
    num_heads = 4
    num_kv_heads = 2
    depth = 2
    B, T = 2, 32
    n_rep = num_heads // num_kv_heads
    head_dim = embed_dim // num_heads // 2   # 32

    key = jax.random.PRNGKey(0)
    ks = jax.random.split(key, 8)
    params = {
        "Wq": 0.05 * jax.random.normal(ks[0], (embed_dim, embed_dim), jnp.float32),
        "Wk": 0.05 * jax.random.normal(ks[1], (embed_dim // n_rep, embed_dim), jnp.float32),
        "Wv": 0.05 * jax.random.normal(ks[2], (embed_dim // n_rep, embed_dim), jnp.float32),
        "Wo": 0.05 * jax.random.normal(ks[3], (embed_dim, embed_dim), jnp.float32),
        "lambda_q1": 0.1 * jax.random.normal(ks[4], (head_dim,), jnp.float32),
        "lambda_k1": 0.1 * jax.random.normal(ks[5], (head_dim,), jnp.float32),
        "lambda_q2": 0.1 * jax.random.normal(ks[6], (head_dim,), jnp.float32),
        "lambda_k2": 0.1 * jax.random.normal(ks[7], (head_dim,), jnp.float32),
        "gamma": jnp.ones((2 * head_dim,), jnp.float32),   # RMSNorm weight
    }

    x = jax.random.normal(jax.random.PRNGKey(42), (B, T, embed_dim), jnp.float32)

    out = multihead_flash_diff(
        x, params, num_heads=num_heads, num_kv_heads=num_kv_heads, depth=depth,
        attn_block_cap=16, proj_tm_cap=16, proj_tk_cap=128, out_tn_cap=128)
    out = jax.block_until_ready(out)

    ref = reference(x, params, num_heads=num_heads,
                    num_kv_heads=num_kv_heads, depth=depth)
    assert out.shape == (B, T, embed_dim)
    err = jnp.max(jnp.abs(out - ref))
    # bf16 MXU inputs vs. f32 reference -> loose tolerance.
    assert jnp.allclose(out, ref, rtol=6e-2, atol=6e-2), f"max abs err {err}"

    print("KERNEL_OK")
</pallas_src>

<mosaic_0001>
module attributes {stable_mosaic.version = 11 : i64} {
  func.func @_proj_heads_kernel(%arg0: i32, %arg1: i32, %arg2: i32, %arg3: i32, %arg4: memref<1x16x128xbf16, #tpu.memory_space<vmem>>, %arg5: memref<1x128x64xbf16, #tpu.memory_space<vmem>>, %arg6: memref<1x1x16x64xbf16, #tpu.memory_space<vmem>>, %arg7: memref<16x64xf32, #tpu.memory_space<vmem>>) attributes {dimension_semantics = [#tpu.dimension_semantics<parallel>, #tpu.dimension_semantics<parallel>, #tpu.dimension_semantics<parallel>, #tpu.dimension_semantics<arbitrary>], iteration_bounds = array<i64: 2, 2, 4, 2>, scalar_prefetch = 0 : i64, scratch_operands = 1 : i64, tpu.core_type = #tpu.core_type<tc>, window_params = [{transform_indices = @transform_0, window_bounds = array<i64: 1, 16, 128>}, {transform_indices = @transform_1, window_bounds = array<i64: 1, 128, 64>}, {transform_indices = @transform_2, window_bounds = array<i64: 1, 1, 16, 64>}]} {
    %c0_i32 = arith.constant 0 : i32
    %0 = arith.cmpi eq, %arg3, %c0_i32 : i32
    %1 = arith.extui %0 : i1 to i32
    %c0_i32_0 = arith.constant 0 : i32
    %2 = arith.cmpi ne, %1, %c0_i32_0 : i32
    scf.if %2 {
      %cst_11 = arith.constant 0.000000e+00 : f32
      %14 = vector.broadcast %cst_11 : f32 to vector<16x64xf32>
      %c0_12 = arith.constant 0 : index
      %c0_13 = arith.constant 0 : index
      %15 = vector.load %arg7[%c0_12, %c0_13] : memref<16x64xf32, #tpu.memory_space<vmem>>, vector<16x64xf32>
      tpu.vector_store %arg7[%c0_12, %c0_13], %14 {strides = array<i32>} : memref<16x64xf32, #tpu.memory_space<vmem>>, vector<16x64xf32>,
    } else {
    }
    %c0 = arith.constant 0 : index
    %c0_1 = arith.constant 0 : index
    %3 = vector.load %arg7[%c0, %c0_1] : memref<16x64xf32, #tpu.memory_space<vmem>>, vector<16x64xf32>
    %c0_2 = arith.constant 0 : index
    %c0_3 = arith.constant 0 : index
    %c0_4 = arith.constant 0 : index
    %4 = vector.load %arg4[%c0_2, %c0_3, %c0_4] : memref<1x16x128xbf16, #tpu.memory_space<vmem>>, vector<1x16x128xbf16>
    %5 = vector.shape_cast %4 : vector<1x16x128xbf16> to vector<16x128xbf16>
    %c0_5 = arith.constant 0 : index
    %c0_6 = arith.constant 0 : index
    %c0_7 = arith.constant 0 : index
    %6 = vector.load %arg5[%c0_5, %c0_6, %c0_7] : memref<1x128x64xbf16, #tpu.memory_space<vmem>>, vector<1x128x64xbf16>
    %7 = vector.shape_cast %6 : vector<1x128x64xbf16> to vector<128x64xbf16>
    %cst = arith.constant dense<0.000000e+00> : vector<16x64xf32>
    %8 = tpu.matmul %5, %7, %cst {dimension_numbers = #tpu.dot_dimension_numbers<[1], [0], [0], [1], [0, 0, 1, 1], [], []>} : vector<16x128xbf16>, vector<128x64xbf16>, vector<16x64xf32> -> vector<16x64xf32>
    %9 = arith.addf %3, %8 : vector<16x64xf32>
    %c0_8 = arith.constant 0 : index
    %c0_9 = arith.constant 0 : index
    %10 = vector.load %arg7[%c0_8, %c0_9] : memref<16x64xf32, #tpu.memory_space<vmem>>, vector<16x64xf32>
    tpu.vector_store %arg7[%c0_8, %c0_9], %9 {strides = array<i32>} : memref<16x64xf32, #tpu.memory_space<vmem>>, vector<16x64xf32>,
    %c1_i32 = arith.constant 1 : i32
    %11 = arith.cmpi eq, %arg3, %c1_i32 : i32
    %12 = arith.extui %11 : i1 to i32
    %c0_i32_10 = arith.constant 0 : i32
    %13 = arith.cmpi ne, %12, %c0_i32_10 : i32
    scf.if %13 {
      %c0_11 = arith.constant 0 : index
      %c0_12 = arith.constant 0 : index
      %14 = vector.load %arg7[%c0_11, %c0_12] : memref<16x64xf32, #tpu.memory_space<vmem>>, vector<16x64xf32>
      %15 = arith.truncf %14 : vector<16x64xf32> to vector<16x64xbf16>
      %c0_13 = arith.constant 0 : index
      %c0_14 = arith.constant 0 : index
      %c0_15 = arith.constant 0 : index
      %c0_16 = arith.constant 0 : index
      %16 = vector.load %arg6[%c0_13, %c0_14, %c0_15, %c0_16] : memref<1x1x16x64xbf16, #tpu.memory_space<vmem>>, vector<1x1x16x64xbf16>
      %17 = vector.shape_cast %16 : vector<1x1x16x64xbf16> to vector<16x64xbf16>
      %18 = vector.shape_cast %15 : vector<16x64xbf16> to vector<1x1x16x64xbf16>
      tpu.vector_store %arg6[%c0_13, %c0_14, %c0_15, %c0_16], %18 {strides = array<i32>} : memref<1x1x16x64xbf16, #tpu.memory_space<vmem>>, vector<1x1x16x64xbf16>,
    } else {
    }
    return
  }
  func.func @transform_0(%arg0: i32, %arg1: i32, %arg2: i32, %arg3: i32) -> (i32, i32, i32) {
    %c0_i32 = arith.constant 0 : i32
    return %arg0, %arg1, %arg3 : i32, i32, i32
  }
  func.func @transform_1(%arg0: i32, %arg1: i32, %arg2: i32, %arg3: i32) -> (i32, i32, i32) {
    %c0_i32 = arith.constant 0 : i32
    %c0_i32_0 = arith.constant 0 : i32
    return %arg2, %arg3, %c0_i32 : i32, i32, i32
  }
  func.func @transform_2(%arg0: i32, %arg1: i32, %arg2: i32, %arg3: i32) -> (i32, i32, i32, i32) {
    %c0_i32 = arith.constant 0 : i32
    %c0_i32_0 = arith.constant 0 : i32
    return %arg0, %arg2, %arg1, %c0_i32 : i32, i32, i32, i32
  }
}

</mosaic_0001>

<llo_original>
// kernel: tpu_custom_call.1
$region0: #{tpu_custom_call.1}
  #allocation0 [shape = 'u32[]', space=smem, size = 0x4, offset = 0x4, fixed_abs, tag = 'smem constant byte address 0x4 - core index']
  #allocation1 [shape = 'u32[144,128]{1,0:T(1,128)}', space=vmem, size = 0x12000, scoped, tag = 'internal scratch']
  #allocation2 [shape = 'f32[16,64]{1,0:T(8,128)}', space=vmem, size = 0x2000, scoped, tag = 'scratch operand']
  %s0 = inlined_call_operand.vmem [shape: bf16[2,32,256], index: 0, kind: input, shape index: {}]
  %s1 = inlined_call_operand.vmem [shape: bf16[4,256,64], index: 1, kind: input, shape index: {}]
  %s2 = inlined_call_operand.hbm [shape: bf16[2,4,32,64], index: 2, kind: output, shape index: {}]
  %s3 = sld [smem:[#allocation0]]
  $region90: #{tpu_custom_call.1} parent=0
    _
  %s5 = ssub.s32 1, %s3
  %s6 = scalar_select 0, %s5, %s3
  $region1: #{tpu_custom_call.1} parent=0
    #allocation3 [shape = 'u8[8192]{0}', space=vmem, size = 0x2000, scoped, tag = 'input window, operand 0']
    #allocation4 [shape = 'u8[8192]{0}', space=vmem, size = 0x2000, scoped, tag = 'output window, operand 0']
    #allocation5 [shape = 's32[2]{0}', space=sflag, size = 0x8, scoped, tag = 'scoped memory for tpu_custom_call.1']
    %7 = vsyncpa [#allocation5], 0
    %s8 = scalar_lea.sflag [#allocation5], 1
    %9 = vsyncpa %s8, 0
    loop: start=0, step=1, limit=34
    $region2: #{tpu_custom_call.1} parent=1 // loop_pre_header
      _
    $region3: #{tpu_custom_call.1} parent=1 // loop_header
      %s11 = sphi 0, %s15
      %p12 = scmp.ge.s32.totalorder %s11, 34
      %s18 = sphi 0, %s44
      %s19 = sphi 0, %s40
      %s20 = sphi 0, %s36
      %s21 = sphi 0, %s32
      %s22 = sphi 0, %s18
      %s23 = sphi 0, %s19
      %s24 = sphi 0, %s20
      %s25 = sphi 0, %s21
      %s26 = sphi 0, %s22
      %s27 = sphi 0, %s23
      %s28 = sphi 0, %s24
      %s29 = sphi 0, %s25
      %s51 = sphi 0, %s53
      %s54 = sphi 0, %s51
      %s55 = sphi 0, %s54
      %s71 = sphi 0, %s55
      %s79 = sphi 0, %s81
      %s82 = sphi 0, %s79
      %s83 = sphi 0, %s82
      %s99 = sphi 0, %s83
      %s109 = sphi 0, %s111
      %s112 = sphi 0, %s109
      %s113 = sphi 0, %s112
      %s129 = sphi 0, %s113
    $region4: #{tpu_custom_call.1} parent=1 // loop_header_branch
      %14 = sbr.rel (%p12) target = $region8
    $region5: #{tpu_custom_call.1} parent=1 // loop_body
      %s16 = ssub.s32 %s11, 1
      %s17 = ssub.s32 %s11, 2
      %s30 = sadd.s32 1, %s21
      %p31 = scmp.ge.s32.totalorder %s30, 2
      %s32 = scalar_select %p31, 0, %s30
      %s33 = sadd.s32 1, %s20
      %s34 = scalar_select %p31, %s33, %s20
      %p35 = scmp.ge.s32.totalorder %s34, 4
      %s36 = scalar_select %p35, 0, %s34
      %s37 = sadd.s32 1, %s19
      %s38 = scalar_select %p35, %s37, %s19
      %p39 = scmp.ge.s32.totalorder %s38, 2
      %s40 = scalar_select %p39, 0, %s38
      %s41 = sadd.s32 1, %s18
      %s42 = scalar_select %p39, %s41, %s18
      %p43 = scmp.ge.s32.totalorder %s42, 2
      %s44 = scalar_select %p43, 0, %s42
      %s45 = ssub.s32 %s18, %s44
      %s46 = ssub.s32 %s19, %s40
      %s47 = sor.u32 %s45, %s46
      %s48 = ssub.s32 %s21, %s32
      %s49 = sor.u32 %s47, %s48
      %p50 = scmp.eq.s32.totalorder %s49, 0
      %s52 = sadd.s32 %s51, 1
      %s53 = scalar_select %p50, %s51, %s52
      %p56 = pneg %p50
      %p57 = scmp.eq.s32.totalorder %s11, 31
      %p58 = por %p56, %p57
      %p59 = scmp.ne.s32.totalorder %s51, %s54
      %p60 = scmp.eq.s32.totalorder %s11, 0
      %p61 = por %p59, %p60
      %p62 = scmp.ne.s32.totalorder %s51, %s54
      %p63 = scmp.eq.s32.totalorder %s16, 31
      %p64 = por %p62, %p63
      %p65 = scmp.ne.s32.totalorder %s54, %s55
      %p66 = scmp.eq.s32.totalorder %s16, 0
      %p67 = por %p65, %p66
      %p68 = scmp.ne.s32.totalorder %s54, %s55
      %p69 = scmp.eq.s32.totalorder %s17, 31
      %p70 = por %p68, %p69
      %p72 = scmp.ne.s32.totalorder %s55, %s71
      %p73 = scmp.eq.s32.totalorder %s17, 0
      %p74 = por %p72, %p73
      %s75 = ssub.s32 %s20, %s36
      %s76 = ssub.s32 %s21, %s32
      %s77 = sor.u32 %s75, %s76
      %p78 = scmp.eq.s32.totalorder %s77, 0
      %s80 = sadd.s32 %s79, 1
      %s81 = scalar_select %p78, %s79, %s80
      %p84 = pneg %p78
      %p85 = scmp.eq.s32.totalorder %s11, 31
      %p86 = por %p84, %p85
      %p87 = scmp.ne.s32.totalorder %s79, %s82
      %p88 = scmp.eq.s32.totalorder %s11, 0
      %p89 = por %p87, %p88
      %p90 = scmp.ne.s32.totalorder %s79, %s82
      %p91 = scmp.eq.s32.totalorder %s16, 31
      %p92 = por %p90, %p91
      %p93 = scmp.ne.s32.totalorder %s82, %s83
      %p94 = scmp.eq.s32.totalorder %s16, 0
      %p95 = por %p93, %p94
      %p96 = scmp.ne.s32.totalorder %s82, %s83
      %p97 = scmp.eq.s32.totalorder %s17, 31
      %p98 = por %p96, %p97
      %p100 = scmp.ne.s32.totalorder %s83, %s99
      %p101 = scmp.eq.s32.totalorder %s17, 0
      %p102 = por %p100, %p101
      %s103 = ssub.s32 %s18, %s44
      %s104 = ssub.s32 %s20, %s36
      %s105 = sor.u32 %s103, %s104
      %s106 = ssub.s32 %s19, %s40
      %s107 = sor.u32 %s105, %s106
      %p108 = scmp.eq.s32.totalorder %s107, 0
      %s110 = sadd.s32 %s109, 1
      %s111 = scalar_select %p108, %s109, %s110
      %p114 = pneg %p108
      %p115 = scmp.eq.s32.totalorder %s11, 31
      %p116 = por %p114, %p115
      %p117 = scmp.ne.s32.totalorder %s109, %s112
      %p118 = scmp.eq.s32.totalorder %s11, 0
      %p119 = por %p117, %p118
      %p120 = scmp.ne.s32.totalorder %s109, %s112
      %p121 = scmp.eq.s32.totalorder %s16, 31
      %p122 = por %p120, %p121
      %p123 = scmp.ne.s32.totalorder %s112, %s113
      %p124 = scmp.eq.s32.totalorder %s16, 0
      %p125 = por %p123, %p124
      %p126 = scmp.ne.s32.totalorder %s112, %s113
      %p127 = scmp.eq.s32.totalorder %s17, 31
      %p128 = por %p126, %p127
      %p130 = scmp.ne.s32.totalorder %s113, %s129
      %p131 = scmp.eq.s32.totalorder %s17, 0
      %p132 = por %p130, %p131
      %p133 = scmp.le.s32.totalorder 1, %s11
      %p134 = scmp.lt.s32.totalorder %s11, 33
      %p135 = pnand %p133, %p134
      %p136 = pneg %p135
      // Predicated region
      $region9: #{tpu_custom_call.1} parent=5 // pred_check
        _
      $region10: #{tpu_custom_call.1} parent=5 // pred_check_branch
        %138 = sbr.rel (%p135) target = $region12
      $region11: #{tpu_custom_call.1} parent=5 // pred_region
        %s139 = ssub.s32 %s11, 1
      $region12: #{tpu_custom_call.1} parent=5 // pred_fallthru
        _
      %p140 = scmp.lt.s32.totalorder %s11, 32
      // Predicated region
      $region13: #{tpu_custom_call.1} parent=5 // pred_check
        %p141 = pneg %p140
      $region14: #{tpu_custom_call.1} parent=5 // pred_check_branch
        %143 = sbr.rel (%p141) target = $region16
      $region15: #{tpu_custom_call.1} parent=5 // pred_region
        // Predicated region
        $region17: #{tpu_custom_call.1} parent=15 // pred_check
          %p144 = pneg %p61
        $region18: #{tpu_custom_call.1} parent=15 // pred_check_branch
          %146 = sbr.rel (%p144) target = $region20
        $region19: #{tpu_custom_call.1} parent=15 // pred_region
          %s147 = sand.u32 %s51, 1
          %s148 = sand.u32 %s51, 1
          %s149 = smul.addr %s148, 8
          %s150 = scalar_lea.vmem [#allocation3], %s149
          %s151 = smul.u32 2, %s19
          %s152 = smul.addr %s151, 2
          %s153 = sadd.s32 %s21, %s152
          %s154 = smul.addr %s18, 8
          %s155 = sadd.s32 %s153, %s154
          %s156 = smul.addr %s155, 4
          %s157 = scalar_lea.vmem %s0, %s156
          // Predicated region
          $region21: #{tpu_custom_call.1} parent=19 // pred_check
            _
          $region22: #{tpu_custom_call.1} parent=19 // pred_check_branch
            %159 = sbr.rel (0) target = $region24
          $region23: #{tpu_custom_call.1} parent=19 // pred_region
            // Predicated region
            $region25: #{tpu_custom_call.1} parent=23 // pred_check
              _
            $region26: #{tpu_custom_call.1} parent=23 // pred_check_branch
              %161 = sbr.rel target = $region28
            $region27: #{tpu_custom_call.1} parent=23 // pred_region
              // Predicated region
              $region40: #{tpu_custom_call.1} parent=27 // pred_check
                _
              $region41: #{tpu_custom_call.1} parent=27 // pred_check_branch
                %178 = sbr.rel (0) target = $region43
              $region42: #{tpu_custom_call.1} parent=27 // pred_region
                loop: start=0, step=1, limit=1
                $region44: #{tpu_custom_call.1} parent=42 // loop_pre_header
                  _
                $region45: #{tpu_custom_call.1} parent=42 // loop_header
                  %s180 = sphi 0, %s184
                  %p181 = scmp.ge.s32.totalorder %s180, 1
                  %s185 = sphi %s157, %s157
                  %s186 = sphi %s150, %s150
                $region46: #{tpu_custom_call.1} parent=42 // loop_header_branch
                  %183 = sbr.rel (%p181) target = $region50
                $region47: #{tpu_custom_call.1} parent=42 // loop_body
                  _
                $region48: #{tpu_custom_call.1} parent=42 // loop_footer
                  %s184 = sadd.s32 1, %s180
                $region49: #{tpu_custom_call.1} parent=42 // loop_footer_branch
                  %179 = sbr.rel target = $region45
                $region50: #{tpu_custom_call.1} parent=42 // loop_exit
                  _
                loop: start=0, step=1, limit=1
                $region51: #{tpu_custom_call.1} parent=42 // loop_pre_header
                  _
                $region52: #{tpu_custom_call.1} parent=42 // loop_header
                  %s189 = sphi 0, %s193
                  %p190 = scmp.ge.s32.totalorder %s189, 1
                  %s194 = sphi %s157, %s157
                  %s195 = sphi %s150, %s150
                $region53: #{tpu_custom_call.1} parent=42 // loop_header_branch
                  %192 = sbr.rel (%p190) target = $region57
                $region54: #{tpu_custom_call.1} parent=42 // loop_body
                  %v196 = vld [vmem:[%s194] sm:$0xf]
                  %197 = vst [vmem:[%s195] sm:$0xf] %v196
                  %v198 = vld [vmem:[%s194 + $0x8] sm:$0xf]
                  %199 = vst [vmem:[%s195 + $0x4] sm:$0xf] %v198
                $region55: #{tpu_custom_call.1} parent=42 // loop_footer
                  %s193 = sadd.s32 1, %s189
                $region56: #{tpu_custom_call.1} parent=42 // loop_footer_branch
                  %188 = sbr.rel target = $region52
                $region57: #{tpu_custom_call.1} parent=42 // loop_exit
                  _
              $region43: #{tpu_custom_call.1} parent=27 // pred_fallthru
                _
            $region28: #{tpu_custom_call.1} parent=23 // pred_fallthru
              _
            // Predicated region
            $region29: #{tpu_custom_call.1} parent=23 // pred_check
              _
            $region30: #{tpu_custom_call.1} parent=23 // pred_check_branch
              %163 = sbr.rel (0) target = $region32
            $region31: #{tpu_custom_call.1} parent=23 // pred_region
              loop: start=0, step=1, limit=1
              $region33: #{tpu_custom_call.1} parent=31 // loop_pre_header
                _
              $region34: #{tpu_custom_call.1} parent=31 // loop_header
                %s166 = sphi 0, %s170
                %p167 = scmp.ge.s32.totalorder %s166, 1
                %s171 = sphi %s157, %s157
                %s172 = sphi %s150, %s150
              $region35: #{tpu_custom_call.1} parent=31 // loop_header_branch
                %169 = sbr.rel (%p167) target = $region39
              $region36: #{tpu_custom_call.1} parent=31 // loop_body
                %v173 = vld [vmem:[%s171] sm:$0xf]
                %174 = vst [vmem:[%s172] sm:$0xf] %v173
                %v175 = vld [vmem:[%s171 + $0x8] sm:$0xf]
                %176 = vst [vmem:[%s172 + $0x4] sm:$0xf] %v175
              $region37: #{tpu_custom_call.1} parent=31 // loop_footer
                %s170 = sadd.s32 1, %s166
              $region38: #{tpu_custom_call.1} parent=31 // loop_footer_branch
                %165 = sbr.rel target = $region34
              $region39: #{tpu_custom_call.1} parent=31 // loop_exit
                _
            $region32: #{tpu_custom_call.1} parent=23 // pred_fallthru
              _
          $region24: #{tpu_custom_call.1} parent=19 // pred_fallthru
            _
          %200 = vnop
        $region20: #{tpu_custom_call.1} parent=15 // pred_fallthru
          _
        // Predicated region
        $region58: #{tpu_custom_call.1} parent=15 // pred_check
          %p201 = pneg %p89
        $region59: #{tpu_custom_call.1} parent=15 // pred_check_branch
          %203 = sbr.rel (%p201) target = $region61
        $region60: #{tpu_custom_call.1} parent=15 // pred_region
          %s204 = smul.u32 16, %s21
          %p205 = scmp.lt.s32.totalorder %s20, 3
          %s206 = scalar_select %p205, %s20, 3
          %p207 = scmp.lt.s32.totalorder %s204, 31
          %s208 = scalar_select %p207, %s204, 31
          %s209 = smul.addr %s206, 32
          %s210 = sadd.s32 %s208, %s209
          %s211 = smul.addr %s210, 4
          %s212 = scalar_lea.vmem %s1, %s211
          %s213 = smul.u32 16, %s21
        $region61: #{tpu_custom_call.1} parent=15 // pred_fallthru
          _
      $region16: #{tpu_custom_call.1} parent=5 // pred_fallthru
        _
      %p214 = scmp.le.s32.totalorder 1, %s11
      %p215 = scmp.lt.s32.totalorder %s11, 33
      %p216 = pnand %p214, %p215
      %p217 = pneg %p216
      // Predicated region
      $region62: #{tpu_custom_call.1} parent=5 // pred_check
        _
      $region63: #{tpu_custom_call.1} parent=5 // pred_check_branch
        %219 = sbr.rel (%p216) target = $region65
      $region64: #{tpu_custom_call.1} parent=5 // pred_region
        %s220 = ssub.s32 %s11, 1
        %s221 = sand.u32 %s54, 1
        %s222 = sand.u32 %s54, 1
        %s223 = smul.addr %s222, 8
        %s224 = scalar_lea.vmem [#allocation3], %s223
        // Predicated region
        $region66: #{tpu_custom_call.1} parent=64 // pred_check
          %p225 = pneg %p67
        $region67: #{tpu_custom_call.1} parent=64 // pred_check_branch
          %227 = sbr.rel (%p225) target = $region69
        $region68: #{tpu_custom_call.1} parent=64 // pred_region
          _
        $region69: #{tpu_custom_call.1} parent=64 // pred_fallthru
          _
        %s228 = sand.u32 %s54, 1
        %s229 = sand.u32 %s54, 1
        %s230 = smul.addr %s229, 8
        %s231 = scalar_lea.vmem [#allocation3], %s230
        %p232 = pneg %p67
        %p233 = pneg %p64
        %s234 = smul.u32 16, %s25
        %p235 = scmp.lt.s32.totalorder %s24, 3
        %s236 = scalar_select %p235, %s24, 3
        %p237 = scmp.lt.s32.totalorder %s234, 31
        %s238 = scalar_select %p237, %s234, 31
        %s239 = smul.addr %s236, 32
        %s240 = sadd.s32 %s238, %s239
        %s241 = smul.addr %s240, 4
        %s242 = scalar_lea.vmem %s1, %s241
        %p243 = pneg %p95
        %p244 = pneg %p92
        %p245 = pneg %p125
        %p246 = pneg %p122
        %s247 = sand.u32 %s112, 1
        %s248 = scalar_lea.sflag [#allocation5], %s247
        %s249 = sand.u32 %s112, 1
        %s250 = smul.addr %s249, 8
        %s251 = scalar_lea.vmem [#allocation4], %s250
        %s252 = smul.u32 2, %s23
        %s253 = smul.u32 16, %s25
        %p254 = scmp.lt.s32.totalorder %s24, 3
        %s255 = scalar_select %p254, %s24, 3
        %p256 = scmp.lt.s32.totalorder %s253, 31
        %s257 = scalar_select %p256, %s253, 31
        %s258 = smul.addr %s255, 32
        %s259 = sadd.s32 %s257, %s258
        %s260 = smul.addr %s259, 4
        %s261 = scalar_lea.vmem %s1, %s260
        %s262 = smul.u32 16, %s25
        %s263 = smul.u32 2, %s23
        %p265 = scmp.eq.s32.totalorder %s25, 0
        // Predicated region
        $region70: #{tpu_custom_call.1} parent=64 // pred_check
          %p266 = pneg %p265
        $region71: #{tpu_custom_call.1} parent=64 // pred_check_branch
          %268 = sbr.rel (%p266) target = $region73
        $region72: #{tpu_custom_call.1} parent=64 // pred_region
          %vm269 = vcmask 523264
          %270 = vst.msk [vmem:[#allocation2] sm:$0xff] %vm269, 0.0
          %271 = vst.msk [vmem:[#allocation2 + $0x8] sm:$0xff] %vm269, 0.0
        $region73: #{tpu_custom_call.1} parent=64 // pred_fallthru
          _
        %v272 = vld [vmem:[#allocation2] sm:$0xff]
        %v273 = vld [vmem:[#allocation2 + $0x8] sm:$0xff]
        %v274 = vld [vmem:[%s224] sm:$0xf]
        %v275 = vld [vmem:[%s224 + $0x4] sm:$0xf]
        %v276 = vld [vmem:[%s261] sm:$0xf]
        %v277 = vld [vmem:[%s261 + $0x4] sm:$0xf]
        %v278 = vld [vmem:[%s261 + $0x8] sm:$0xf]
        %v279 = vld [vmem:[%s261 + $0xc] sm:$0xf]
        %v280 = vld [vmem:[%s261 + $0x10] sm:$0xf]
        %v281 = vld [vmem:[%s261 + $0x14] sm:$0xf]
        %v282 = vld [vmem:[%s261 + $0x18] sm:$0xf]
        %v283 = vld [vmem:[%s261 + $0x1c] sm:$0xf]
        %v284 = vld [vmem:[%s261 + $0x20] sm:$0xf]
        %v285 = vld [vmem:[%s261 + $0x24] sm:$0xf]
        %v286 = vld [vmem:[%s261 + $0x28] sm:$0xf]
        %v287 = vld [vmem:[%s261 + $0x2c] sm:$0xf]
        %v288 = vld [vmem:[%s261 + $0x30] sm:$0xf]
        %v289 = vld [vmem:[%s261 + $0x34] sm:$0xf]
        %v290 = vld [vmem:[%s261 + $0x38] sm:$0xf]
        %v291 = vld [vmem:[%s261 + $0x3c] sm:$0xf]
        %v294 = vunpack.c.l.b16 %v274
        %v295 = vunpack.c.l.b16 %v275
        %v296 = vpack.c.b16 %v295, %v294
        %v314 = vunpack.c.l.b16 %v276
        %v315 = vunpack.c.l.b16 %v277
        %v316 = vunpack.c.l.b16 %v278
        %v317 = vunpack.c.l.b16 %v279
        %v318 = vunpack.c.l.b16 %v280
        %v319 = vunpack.c.l.b16 %v281
        %v320 = vunpack.c.l.b16 %v282
        %v321 = vunpack.c.l.b16 %v283
        %v322 = vunpack.c.l.b16 %v284
        %v323 = vunpack.c.l.b16 %v285
        %v324 = vunpack.c.l.b16 %v286
        %v325 = vunpack.c.l.b16 %v287
        %v326 = vunpack.c.l.b16 %v288
        %v327 = vunpack.c.l.b16 %v289
        %v328 = vunpack.c.l.b16 %v290
        %v329 = vunpack.c.l.b16 %v291
        %v330 = vpack.c.b16 %v315, %v314
        %v331 = vpack.c.b16 %v317, %v316
        %v332 = vpack.c.b16 %v319, %v318
        %v333 = vpack.c.b16 %v321, %v320
        %v334 = vpack.c.b16 %v323, %v322
        %v335 = vpack.c.b16 %v325, %v324
        %v336 = vpack.c.b16 %v327, %v326
        %v337 = vpack.c.b16 %v329, %v328
        %346 = vmatprep.subr.bf16.mxu0 0
        %347 = vmatpush1.bf16.msra.mxu0 %v330
        %348 = vmatprep.subr.bf16.mxu0 0
        %349 = vmatpush1.bf16.msra.mxu0 %v331
        %350 = vmatprep.subr.bf16.mxu0 0
        %351 = vmatpush1.bf16.msra.mxu0 %v332
        %352 = vmatprep.subr.bf16.mxu0 0
        %353 = vmatpush1.bf16.msra.mxu0 %v333
        %354 = vmatprep.subr.bf16.mxu0 0
        %355 = vmatpush1.bf16.msra.mxu0 %v334
        %356 = vmatprep.subr.bf16.mxu0 0
        %357 = vmatpush1.bf16.msra.mxu0 %v335
        %358 = vmatprep.subr.bf16.mxu0 0
        %359 = vmatpush1.bf16.msra.mxu0 %v336
        %360 = vmatprep.subr.bf16.mxu0 0
        %361 = vmatpush1.bf16.msra.mxu0 %v337
        %362 = vmatprep.subr.bf16.mxu0 0
        %363 = vmatpush1.bf16.msra.mxu0 0
        %364 = vmatprep.subr.bf16.mxu0 0
        %365 = vmatpush1.bf16.msra.mxu0 0
        %366 = vmatprep.subr.bf16.mxu0 0
        %367 = vmatpush1.bf16.msra.mxu0 0
        %368 = vmatprep.subr.bf16.mxu0 0
        %369 = vmatpush1.bf16.msra.mxu0 0
        %370 = vmatprep.subr.bf16.mxu0 0
        %371 = vmatpush1.bf16.msra.mxu0 0
        %372 = vmatprep.subr.bf16.mxu0 0
        %373 = vmatpush1.bf16.msra.mxu0 0
        %374 = vmatprep.subr.bf16.mxu0 0
        %375 = vmatpush1.bf16.msra.mxu0 0
        %376 = vmatprep.subr.bf16.mxu0 0
        %377 = vmatpush1.bf16.msra.mxu0 0
        %378 = vmatprep.mubr.bf16.mxu0 0
        %379 = vmatmul.mubr.bf16.gmra.mrb[0].mxu0 %v296
        %v380 = vpop.f32.mrb[0].mxu0
        %v381 = vadd.f32 0.0, %v380
        %v382 = vpop.f32.mrb[0].mxu0
        %v383 = vpop.f32.mrb[0].mxu0
        %v384 = vadd.f32 0.0, %v383
        %v385 = vpop.f32.mrb[0].mxu0
        %386 = vdwg.mxu0
        %v387 = vadd.f32 %v272, %v381
        %v388 = vadd.f32 %v273, %v384
        %vm389 = vcmask 523264
        %390 = vst.msk [vmem:[#allocation2] sm:$0xff] %vm389, %v387
        %391 = vst.msk [vmem:[#allocation2 + $0x8] sm:$0xff] %vm389, %v388
        %p392 = scmp.eq.s32.totalorder %s25, 1
        // Predicated region
        $region74: #{tpu_custom_call.1} parent=64 // pred_check
          %p393 = pneg %p392
        $region75: #{tpu_custom_call.1} parent=64 // pred_check_branch
          %395 = sbr.rel (%p393) target = $region77
        $region76: #{tpu_custom_call.1} parent=64 // pred_region
          %v396 = vld [vmem:[#allocation2] sm:$0xff]
          %v397 = vld [vmem:[#allocation2 + $0x8] sm:$0xff]
          %v398 = vpack.c.bf16 %v397, %v396
          %v400 = vunpack.c.l.b16 %v398
          %v401 = vunpack.c.h.b16 %v398
          %v402 = vpack.c.b16 %v400, %v400
          %v403 = vpack.c.b16 %v401, %v401
          %vm406 = vcmask 519168
          %407 = vst.msk [vmem:[%s251] sm:$0xf] %vm406, %v402
          %408 = vst.msk [vmem:[%s251 + $0x4] sm:$0xf] %vm406, %v403
        $region77: #{tpu_custom_call.1} parent=64 // pred_fallthru
          _
        %s409 = sand.u32 %s112, 1
        %s410 = scalar_lea.sflag [#allocation5], %s409
        %s411 = sand.u32 %s112, 1
        %s412 = smul.addr %s411, 8
        %s413 = scalar_lea.vmem [#allocation4], %s412
        // Predicated region
        $region78: #{tpu_custom_call.1} parent=64 // pred_check
          %p414 = pneg %p122
        $region79: #{tpu_custom_call.1} parent=64 // pred_check_branch
          %416 = sbr.rel (%p414) target = $region81
        $region80: #{tpu_custom_call.1} parent=64 // pred_region
          %s417 = smul.u32 2, %s23
          %s419 = ssub.s32 128, 128
          %420 = vsyncadd %s410, %s419
          %s421 = smul.addr %s24, 4
          %s422 = sadd.s32 %s417, %s421
          %s423 = smul.addr %s22, 16
          %s424 = sadd.s32 %s422, %s423
          %s425 = smul.addr %s424, 64
          %s426 = scalar_lea.hbm %s2, %s425
          %s427 = sshll.u32 %s413, 4
          %s428 = int_to_ptr.vmem [resolvable:$true] %s427
          %433 = dma.vmem_to_hbm [thread:$0]  %s428, 128, %s426, %s410, 64, 64, 4
        $region81: #{tpu_custom_call.1} parent=64 // pred_fallthru
          _
      $region65: #{tpu_custom_call.1} parent=5 // pred_fallthru
        _
      %p434 = scmp.le.s32.totalorder 2, %s11
      // Predicated region
      $region82: #{tpu_custom_call.1} parent=5 // pred_check
        %p435 = pneg %p434
      $region83: #{tpu_custom_call.1} parent=5 // pred_check_branch
        %437 = sbr.rel (%p435) target = $region85
      $region84: #{tpu_custom_call.1} parent=5 // pred_region
        %s438 = ssub.s32 %s11, 2
        // Predicated region
        $region86: #{tpu_custom_call.1} parent=84 // pred_check
          %p439 = pneg %p128
        $region87: #{tpu_custom_call.1} parent=84 // pred_check_branch
          %441 = sbr.rel (%p439) target = $region89
        $region88: #{tpu_custom_call.1} parent=84 // pred_region
          %s442 = sand.u32 %s113, 1
          %s443 = scalar_lea.sflag [#allocation5], %s442
          %s444 = sand.u32 %s113, 1
          %s445 = smul.addr %s444, 8
          %s446 = scalar_lea.vmem [#allocation4], %s445
          %447 = dma.done %s443, 128
        $region89: #{tpu_custom_call.1} parent=84 // pred_fallthru
          _
      $region85: #{tpu_custom_call.1} parent=5 // pred_fallthru
        _
    $region6: #{tpu_custom_call.1} parent=1 // loop_footer
      %s15 = sadd.s32 1, %s11
    $region7: #{tpu_custom_call.1} parent=1 // loop_footer_branch
      %10 = sbr.rel target = $region3
    $region8: #{tpu_custom_call.1} parent=1 // loop_exit
      _
    %448 = vsyncpa [#allocation5], 1
    %s449 = scalar_lea.sflag [#allocation5], 1
    %450 = vsyncpa %s449, 1

</llo_original>
